<compile_context>
chip_gen: v5e
topology: v5e:2x2
jax: 0.10.0
libtpu: 0.0.40
codegen_flags: <defaults>
</compile_context>

<pallas_src>
import functools

import jax
import jax.numpy as jnp
from jax.experimental import pallas as pl
from jax.experimental.pallas import tpu as pltpu


def _focal_loss_kernel(x_ref, t_ref, o_ref, *,
                       alpha, gamma, lane, row_tile, n_tiles, tiles_per_part,
                       n_valid, last_partial, hard_targets):
    p = pl.program_id(0)                       # parallel part (TensorCore split)
    j = pl.program_id(1)                       # reduction step within the part
    g = p * tiles_per_part + j                 # global row-tile index

    @pl.when(j == 0)
    def _init():                               # output block is the accumulator
        o_ref[...] = jnp.zeros_like(o_ref)

    x = x_ref[...].astype(jnp.float32)
    t = t_ref[...].astype(jnp.float32)

    # Numerically stable BCE-with-logits (PyTorch formula):
    #   max(x, 0) - x*t + log(1 + exp(-|x|));   exp(-|x|) is reused below.
    e = jnp.exp(-jnp.abs(x))
    bce = jnp.maximum(x, 0.0) - x * t + jnp.log(1.0 + e)

    if hard_targets:
        # Exact for 0/1 targets: pt = sigmoid(x) if t==1 else 1-sigmoid(x).
        # Saves one exp per element; approx reciprocal runs on the EUP.
        pt = (jnp.where((x >= 0.0) == (t >= 0.5), 1.0, e)
              * pl.reciprocal(1.0 + e, approx=True))
    else:
        pt = jnp.exp(-bce)

    # at = alpha*t + (1-alpha)*(1-t), folded to one multiply-add.
    at = (1.0 - alpha) + (2.0 * alpha - 1.0) * t

    one_m_pt = 1.0 - pt
    if float(gamma) == int(gamma) and int(gamma) >= 0:
        mod = None
        for _ in range(int(gamma)):            # integer gamma: repeated multiply
            mod = one_m_pt if mod is None else mod * one_m_pt
    else:                                      # generic gamma via exp/log (EUP)
        mod = jnp.exp(float(gamma) * jnp.log(jnp.maximum(one_m_pt, 1e-30)))

    fl = at * bce if mod is None else at * mod * bce

    # Lane-dense partial sums: sublane (XLU) reduce per step only; the single
    # cross-lane reduction happens in the wrapper.  Masking runs only on the
    # (single) partial tail tile; tiles past n_tiles (core-split overhang)
    # contribute nothing.
    if last_partial:
        @pl.when(g < n_tiles - 1)
        def _acc_full():
            o_ref[...] += jnp.sum(fl, axis=0, keepdims=True)

        @pl.when(g == n_tiles - 1)
        def _acc_tail():
            r = jax.lax.broadcasted_iota(jnp.int32, fl.shape, 0)
            c = jax.lax.broadcasted_iota(jnp.int32, fl.shape, 1)
            flat = (g * row_tile + r) * lane + c      # flat element index
            o_ref[...] += jnp.sum(jnp.where(flat < n_valid, fl, 0.0),
                                  axis=0, keepdims=True)
    else:
        @pl.when(g < n_tiles)
        def _acc_full():
            o_ref[...] += jnp.sum(fl, axis=0, keepdims=True)


def focal_loss(logits, targets, *, alpha=0.25, gamma=2, hard_targets=False):
    """Mean focal loss over all elements (matches FocalLoss.forward)."""
    assert logits.shape == targets.shape
    n = int(logits.size)

    x = logits.reshape(-1)
    t = targets.reshape(-1)

    # Lane-dense 2-D view.  A contiguous reshape is free when the element
    # count divides a multiple-of-128 lane width; only otherwise do we pay a
    # minimal flat pad (and the lane-density win dwarfs that single pass).
    lane = None
    for cand in (1024, 512, 256, 128):
        if n % cand == 0:
            lane = cand
            break
    if lane is None:
        lane = 128
        n_pad = pl.cdiv(n, lane) * lane
        x = jnp.pad(x, (0, n_pad - n))
        t = jnp.pad(t, (0, n_pad - n))
    else:
        n_pad = n
    rows = n_pad // lane
    x = x.reshape(rows, lane)
    t = t.reshape(rows, lane)

    # Row tile from a VMEM byte budget: ~2 MiB per input per pipeline buffer
    # => 2 inputs x 2 buffers ~ 8 MiB, within default scoped VMEM on all chips.
    itemsize = max(x.dtype.itemsize, t.dtype.itemsize)
    target_block_bytes = 2 * 1024 * 1024
    tm = max(8, (target_block_bytes // (lane * itemsize)) // 8 * 8)
    if rows <= tm:
        tm = rows                               # single tile covers all rows
    n_tiles = pl.cdiv(rows, tm)
    last_partial = (n_tiles * tm != rows) or (n_pad != n)

    # Leading parallel axis: lets v7x shard row tiles across its 2 TensorCores
    # (harmless sequential split on v5e/v6e).  Overhang tiles (when n_tiles is
    # odd) clamp their block index and are skipped by the in-kernel guard.
    n_parts = 2 if n_tiles >= 2 else 1
    tiles_per_part = pl.cdiv(n_tiles, n_parts)

    def in_map(p_, j_):
        return (jnp.minimum(p_ * tiles_per_part + j_, n_tiles - 1), 0)

    kernel = functools.partial(
        _focal_loss_kernel,
        alpha=float(alpha), gamma=gamma, lane=lane, row_tile=tm,
        n_tiles=n_tiles, tiles_per_part=tiles_per_part, n_valid=n,
        last_partial=last_partial, hard_targets=hard_targets)

    partial_sums = pl.pallas_call(
        kernel,
        grid=(n_parts, tiles_per_part),
        out_shape=jax.ShapeDtypeStruct((1, n_parts * lane), jnp.float32),
        in_specs=[pl.BlockSpec((tm, lane), in_map),
                  pl.BlockSpec((tm, lane), in_map)],
        out_specs=pl.BlockSpec((1, lane), lambda p_, j_: (0, p_)),
        compiler_params=pltpu.CompilerParams(
            dimension_semantics=("parallel", "arbitrary"),
            vmem_limit_bytes=32 * 1024 * 1024),
        cost_estimate=pl.CostEstimate(
            flops=12 * n, transcendentals=3 * n,
            bytes_accessed=2 * n * itemsize + 4 * n_parts * lane),
    )(x, t)

    # Single cross-lane reduction + mean normalisation (tiny array).
    return jnp.sum(partial_sums) * (1.0 / float(n))


def _focal_loss_ref(logits, targets, alpha=0.25, gamma=2):
    x = logits.astype(jnp.float32)
    t = targets.astype(jnp.float32)
    bce = jnp.maximum(x, 0.0) - x * t + jnp.log1p(jnp.exp(-jnp.abs(x)))
    pt = jnp.exp(-bce)
    at = alpha * t + (1 - alpha) * (1 - t)
    return jnp.mean(at * (1 - pt) ** gamma * bce)


if __name__ == "__main__":
    key = jax.random.PRNGKey(0)
    k1, k2, k3, k4 = jax.random.split(key, 4)

    # Small multi-label shape (as in the classifier module).
    batch, num_labels = 2, 10
    logits = jax.random.normal(k1, (batch, num_labels), jnp.float32)
    targets = jax.random.bernoulli(k2, 0.3, (batch, num_labels)).astype(jnp.float32)

    loss = focal_loss(logits, targets, alpha=0.25, gamma=2)
    jax.block_until_ready(loss)
    ref = _focal_loss_ref(logits, targets)
    assert loss.shape == ()
    assert jnp.allclose(loss, ref, rtol=1e-5, atol=1e-6), (loss, ref)

    # Larger shape: exercises the free lane-dense reshape, multi-tile grid,
    # the two-part (dual TensorCore) split, and the masked partial tail tile.
    big_logits = jax.random.normal(k3, (2048, 640), jnp.float32)
    big_targets = jax.random.bernoulli(k4, 0.3, (2048, 640)).astype(jnp.float32)
    big_loss = focal_loss(big_logits, big_targets)
    jax.block_until_ready(big_loss)
    big_ref = _focal_loss_ref(big_logits, big_targets)
    assert jnp.allclose(big_loss, big_ref, rtol=2e-4, atol=1e-6), (big_loss, big_ref)

    # EUP-reduced path (exact only for hard 0/1 targets; approx reciprocal
    # changes numerics slightly, so compare with a looser tolerance).
    hard_loss = focal_loss(logits, targets, hard_targets=True)
    jax.block_until_ready(hard_loss)
    assert jnp.allclose(hard_loss, ref, rtol=2e-2, atol=1e-3), (hard_loss, ref)

    print("KERNEL_OK")
</pallas_src>

<mosaic_0001>
module attributes {stable_mosaic.version = 11 : i64} {
  func.func @_focal_loss_kernel(%arg0: i32, %arg1: i32, %arg2: memref<1x128xf32, #tpu.memory_space<vmem>>, %arg3: memref<1x128xf32, #tpu.memory_space<vmem>>, %arg4: memref<1x128xf32, #tpu.memory_space<vmem>>) attributes {dimension_semantics = [#tpu.dimension_semantics<parallel>, #tpu.dimension_semantics<arbitrary>], iteration_bounds = array<i64: 1, 1>, scalar_prefetch = 0 : i64, scratch_operands = 0 : i64, tpu.core_type = #tpu.core_type<tc>, window_params = [{transform_indices = @transform_0, window_bounds = array<i64: 1, 128>}, {transform_indices = @transform_1, window_bounds = array<i64: 1, 128>}, {transform_indices = @transform_2, window_bounds = array<i64: 1, 128>}]} {
    %c1_i32 = arith.constant 1 : i32
    %0 = arith.muli %arg0, %c1_i32 : i32
    %1 = arith.addi %0, %arg1 : i32
    %c0_i32 = arith.constant 0 : i32
    %2 = arith.cmpi eq, %arg1, %c0_i32 : i32
    %3 = arith.extui %2 : i1 to i32
    %c0_i32_0 = arith.constant 0 : i32
    %4 = arith.cmpi ne, %3, %c0_i32_0 : i32
    scf.if %4 {
      %cst_14 = arith.constant 0.000000e+00 : f32
      %37 = vector.broadcast %cst_14 : f32 to vector<1x128xf32>
      %c0_15 = arith.constant 0 : index
      %c0_16 = arith.constant 0 : index
      %38 = vector.load %arg4[%c0_15, %c0_16] : memref<1x128xf32, #tpu.memory_space<vmem>>, vector<1x128xf32>
      tpu.vector_store %arg4[%c0_15, %c0_16], %37 {strides = array<i32>} : memref<1x128xf32, #tpu.memory_space<vmem>>, vector<1x128xf32>,
    } else {
    }
    %c0 = arith.constant 0 : index
    %c0_1 = arith.constant 0 : index
    %5 = vector.load %arg2[%c0, %c0_1] : memref<1x128xf32, #tpu.memory_space<vmem>>, vector<1x128xf32>
    %c0_2 = arith.constant 0 : index
    %c0_3 = arith.constant 0 : index
    %6 = vector.load %arg3[%c0_2, %c0_3] : memref<1x128xf32, #tpu.memory_space<vmem>>, vector<1x128xf32>
    %7 = math.absf %5 : vector<1x128xf32>
    %cst = arith.constant 0.000000e+00 : f32
    %8 = vector.broadcast %cst : f32 to vector<1x128xf32>
    %9 = arith.subf %8, %7 : vector<1x128xf32>
    %10 = math.exp %9 : vector<1x128xf32>
    %cst_4 = arith.constant 0.000000e+00 : f32
    %11 = vector.broadcast %cst_4 : f32 to vector<1x128xf32>
    %12 = arith.maximumf %5, %11 : vector<1x128xf32>
    %13 = arith.mulf %5, %6 : vector<1x128xf32>
    %14 = arith.subf %12, %13 : vector<1x128xf32>
    %cst_5 = arith.constant 1.000000e+00 : f32
    %15 = vector.broadcast %cst_5 : f32 to vector<1x128xf32>
    %16 = arith.addf %15, %10 : vector<1x128xf32>
    %17 = math.log %16 : vector<1x128xf32>
    %18 = arith.addf %14, %17 : vector<1x128xf32>
    %cst_6 = arith.constant 0.000000e+00 : f32
    %19 = vector.broadcast %cst_6 : f32 to vector<1x128xf32>
    %20 = arith.subf %19, %18 : vector<1x128xf32>
    %21 = math.exp %20 : vector<1x128xf32>
    %cst_7 = arith.constant -5.000000e-01 : f32
    %22 = vector.broadcast %cst_7 : f32 to vector<1x128xf32>
    %23 = arith.mulf %22, %6 : vector<1x128xf32>
    %cst_8 = arith.constant 7.500000e-01 : f32
    %24 = vector.broadcast %cst_8 : f32 to vector<1x128xf32>
    %25 = arith.addf %24, %23 : vector<1x128xf32>
    %cst_9 = arith.constant 1.000000e+00 : f32
    %26 = vector.broadcast %cst_9 : f32 to vector<1x128xf32>
    %27 = arith.subf %26, %21 : vector<1x128xf32>
    %28 = arith.mulf %27, %27 : vector<1x128xf32>
    %29 = arith.mulf %25, %28 : vector<1x128xf32>
    %30 = arith.mulf %29, %18 : vector<1x128xf32>
    %c0_i32_10 = arith.constant 0 : i32
    %31 = arith.cmpi slt, %1, %c0_i32_10 : i32
    %32 = arith.extui %31 : i1 to i32
    %c0_i32_11 = arith.constant 0 : i32
    %33 = arith.cmpi ne, %32, %c0_i32_11 : i32
    scf.if %33 {
      %c0_14 = arith.constant 0 : index
      %c0_15 = arith.constant 0 : index
      %37 = vector.load %arg4[%c0_14, %c0_15] : memref<1x128xf32, #tpu.memory_space<vmem>>, vector<1x128xf32>
      %cst_16 = arith.constant dense<0.000000e+00> : vector<128xf32>
      %38 = vector.multi_reduction <add>, %30, %cst_16 [0] : vector<1x128xf32> to vector<128xf32>
      %39 = vector.shape_cast %38 : vector<128xf32> to vector<1x128xf32>
      %40 = arith.addf %37, %39 : vector<1x128xf32>
      %c0_17 = arith.constant 0 : index
      %c0_18 = arith.constant 0 : index
      %41 = vector.load %arg4[%c0_17, %c0_18] : memref<1x128xf32, #tpu.memory_space<vmem>>, vector<1x128xf32>
      tpu.vector_store %arg4[%c0_17, %c0_18], %40 {strides = array<i32>} : memref<1x128xf32, #tpu.memory_space<vmem>>, vector<1x128xf32>,
    } else {
    }
    %c0_i32_12 = arith.constant 0 : i32
    %34 = arith.cmpi eq, %1, %c0_i32_12 : i32
    %35 = arith.extui %34 : i1 to i32
    %c0_i32_13 = arith.constant 0 : i32
    %36 = arith.cmpi ne, %35, %c0_i32_13 : i32
    scf.if %36 {
      %37 = tpu.iota {dimensions = array<i32: 0>} : vector<1x128xi32>
      %38 = tpu.iota {dimensions = array<i32: 1>} : vector<1x128xi32>
      %c1_i32_14 = arith.constant 1 : i32
      %39 = arith.muli %1, %c1_i32_14 : i32
      %40 = vector.broadcast %39 : i32 to vector<1x128xi32>
      %41 = arith.addi %40, %37 : vector<1x128xi32>
      %c128_i32 = arith.constant 128 : i32
      %42 = vector.broadcast %c128_i32 : i32 to vector<1x128xi32>
      %43 = arith.muli %41, %42 : vector<1x128xi32>
      %44 = arith.addi %43, %38 : vector<1x128xi32>
      %c0_15 = arith.constant 0 : index
      %c0_16 = arith.constant 0 : index
      %45 = vector.load %arg4[%c0_15, %c0_16] : memref<1x128xf32, #tpu.memory_space<vmem>>, vector<1x128xf32>
      %c20_i32 = arith.constant 20 : i32
      %46 = vector.broadcast %c20_i32 : i32 to vector<1x128xi32>
      %47 = arith.cmpi slt, %44, %46 : vector<1x128xi32>
      %cst_17 = arith.constant 0.000000e+00 : f32
      %48 = vector.broadcast %cst_17 : f32 to vector<1x128xf32>
      %49 = arith.select %47, %30, %48 : vector<1x128xi1>, vector<1x128xf32>
      %cst_18 = arith.constant dense<0.000000e+00> : vector<128xf32>
      %50 = vector.multi_reduction <add>, %49, %cst_18 [0] : vector<1x128xf32> to vector<128xf32>
      %51 = vector.shape_cast %50 : vector<128xf32> to vector<1x128xf32>
      %52 = arith.addf %45, %51 : vector<1x128xf32>
      %c0_19 = arith.constant 0 : index
      %c0_20 = arith.constant 0 : index
      %53 = vector.load %arg4[%c0_19, %c0_20] : memref<1x128xf32, #tpu.memory_space<vmem>>, vector<1x128xf32>
      tpu.vector_store %arg4[%c0_19, %c0_20], %52 {strides = array<i32>} : memref<1x128xf32, #tpu.memory_space<vmem>>, vector<1x128xf32>,
    } else {
    }
    return
  }
  func.func @transform_0(%arg0: i32, %arg1: i32) -> (i32, i32) {
    %c1_i32 = arith.constant 1 : i32
    %0 = arith.muli %arg0, %c1_i32 : i32
    %1 = arith.addi %0, %arg1 : i32
    %c0_i32 = arith.constant 0 : i32
    %2 = arith.minsi %1, %c0_i32 : i32
    %c0_i32_0 = arith.constant 0 : i32
    %c0_i32_1 = arith.constant 0 : i32
    return %2, %c0_i32_0 : i32, i32
  }
  func.func @transform_1(%arg0: i32, %arg1: i32) -> (i32, i32) {
    %c1_i32 = arith.constant 1 : i32
    %0 = arith.muli %arg0, %c1_i32 : i32
    %1 = arith.addi %0, %arg1 : i32
    %c0_i32 = arith.constant 0 : i32
    %2 = arith.minsi %1, %c0_i32 : i32
    %c0_i32_0 = arith.constant 0 : i32
    %c0_i32_1 = arith.constant 0 : i32
    return %2, %c0_i32_0 : i32, i32
  }
  func.func @transform_2(%arg0: i32, %arg1: i32) -> (i32, i32) {
    %c0_i32 = arith.constant 0 : i32
    %c0_i32_0 = arith.constant 0 : i32
    return %c0_i32, %arg0 : i32, i32
  }
}

</mosaic_0001>

<llo_original>
// kernel: tpu_custom_call.1
$region0: #{tpu_custom_call.1}
  #allocation0 [shape = 'u32[]', space=smem, size = 0x4, offset = 0x4, fixed_abs, tag = 'smem constant byte address 0x4 - core index']
  #allocation1 [shape = 'u32[72,128]{1,0:T(1,128)}', space=vmem, size = 0x9000, scoped, tag = 'internal scratch']
  %s0 = inlined_call_operand.hbm [shape: f32[1,128], index: 0, kind: input, shape index: {}]
  %s1 = inlined_call_operand.hbm [shape: f32[1,128], index: 1, kind: input, shape index: {}]
  %s2 = inlined_call_operand.hbm [shape: f32[1,128], index: 2, kind: output, shape index: {}]
  %s3 = sld [smem:[#allocation0]]
  $region38: #{tpu_custom_call.1} parent=0
    _
  %s5 = ssub.s32 1, %s3
  %s6 = scalar_select 0, %s5, %s3
  $region1: #{tpu_custom_call.1} parent=0
    #allocation2 [shape = 'u8[512]{0}', space=vmem, size = 0x400, scoped, tag = 'input window, operand 0, single buffered']
    #allocation3 [shape = 's32[1]{0}', space=sflag, size = 0x4, scoped, tag = 'scoped memory for tpu_custom_call.1']
    #allocation4 [shape = 's32[1]{0}', space=sflag, size = 0x4, scoped, tag = 'scoped memory for tpu_custom_call.1']
    #allocation5 [shape = 'u8[512]{0}', space=vmem, size = 0x400, scoped, tag = 'input window, operand 1, single buffered']
    #allocation6 [shape = 's32[1]{0}', space=sflag, size = 0x4, scoped, tag = 'scoped memory for tpu_custom_call.1']
    #allocation7 [shape = 'u8[512]{0}', space=vmem, size = 0x400, scoped, tag = 'output window, operand 0, single buffered']
    %7 = vsyncpa [#allocation3], 0
    %8 = vsyncpa [#allocation6], 0
    %9 = vsyncpa [#allocation4], 0
    // Predicated region
    $region2: #{tpu_custom_call.1} parent=1 // pred_check
      _
    $region3: #{tpu_custom_call.1} parent=1 // pred_check_branch
      %11 = sbr.rel (0) target = $region5
    $region4: #{tpu_custom_call.1} parent=1 // pred_region
      %s12 = sadd.s32 0, 0
      %p13 = scmp.lt.s32.totalorder %s12, 0
      %s14 = scalar_select %p13, %s12, 0
      %16 = vsyncadd [#allocation3], 0
      %s17 = scalar_lea.hbm %s0, %s14
      %s19 = sshll.u32 %s17, 4
      %s20 = int_to_ptr.hbm [resolvable:$true] %s19
      %s21 = sshll.u32 [#allocation2], 4
      %s22 = int_to_ptr.vmem [resolvable:$true] %s21
      %24 = dma.hbm_to_vmem [thread:$0]  %s20, 16, %s22, [#allocation3]
    $region5: #{tpu_custom_call.1} parent=1 // pred_fallthru
      _
    // Predicated region
    $region6: #{tpu_custom_call.1} parent=1 // pred_check
      _
    $region7: #{tpu_custom_call.1} parent=1 // pred_check_branch
      %26 = sbr.rel (0) target = $region9
    $region8: #{tpu_custom_call.1} parent=1 // pred_region
      %s27 = sadd.s32 0, 0
      %p28 = scmp.lt.s32.totalorder %s27, 0
      %s29 = scalar_select %p28, %s27, 0
      %31 = vsyncadd [#allocation6], 0
      %s32 = scalar_lea.hbm %s1, %s29
      %s34 = sshll.u32 %s32, 4
      %s35 = int_to_ptr.hbm [resolvable:$true] %s34
      %s36 = sshll.u32 [#allocation5], 4
      %s37 = int_to_ptr.vmem [resolvable:$true] %s36
      %39 = dma.hbm_to_vmem [thread:$0]  %s35, 16, %s37, [#allocation6]
    $region9: #{tpu_custom_call.1} parent=1 // pred_fallthru
      _
    // Predicated region
    $region10: #{tpu_custom_call.1} parent=1 // pred_check
      _
    $region11: #{tpu_custom_call.1} parent=1 // pred_check_branch
      %41 = sbr.rel (0) target = $region13
    $region12: #{tpu_custom_call.1} parent=1 // pred_region
      %43 = dma.done [#allocation3], 16
    $region13: #{tpu_custom_call.1} parent=1 // pred_fallthru
      _
    // Predicated region
    $region14: #{tpu_custom_call.1} parent=1 // pred_check
      _
    $region15: #{tpu_custom_call.1} parent=1 // pred_check_branch
      %45 = sbr.rel (0) target = $region17
    $region16: #{tpu_custom_call.1} parent=1 // pred_region
      %47 = dma.done [#allocation6], 16
    $region17: #{tpu_custom_call.1} parent=1 // pred_fallthru
      _
    %s48 = sadd.s32 0, 0
    %p49 = scmp.lt.s32.totalorder %s48, 0
    %s50 = scalar_select %p49, %s48, 0
    %s51 = sadd.s32 0, 0
    %p52 = scmp.lt.s32.totalorder %s51, 0
    %s53 = scalar_select %p52, %s51, 0
    %s54 = sadd.s32 0, 0
    %p55 = scmp.eq.s32.totalorder 0, 0
    // Predicated region
    $region18: #{tpu_custom_call.1} parent=1 // pred_check
      %p56 = pneg %p55
    $region19: #{tpu_custom_call.1} parent=1 // pred_check_branch
      %58 = sbr.rel (%p56) target = $region21
    $region20: #{tpu_custom_call.1} parent=1 // pred_region
      %59 = vst [vmem:[#allocation7] sm:$0x1] 0.0
    $region21: #{tpu_custom_call.1} parent=1 // pred_fallthru
      _
    %v60 = vld [vmem:[#allocation2] sm:$0x1]
    %v61 = vld [vmem:[#allocation5] sm:$0x1]
    %v62 = vand.u32 2147483647, %v60
    %v63 = vsub.f32 0.0, %v62
    %v64 = vmul.f32 %v63, 1.442695
    %v65 = vpow.pop %v64
    %v66 = vmax.f32 %v60, 0.0
    %v67 = vmul.f32 %v60, %v61
    %v68 = vsub.f32 %v66, %v67
    %v69 = vadd.f32 %v65, 1.0
    %v70 = vlog2.pop %v69
    %v71 = vmul.f32 %v70, 0.6931472
    %v72 = vadd.f32 %v68, %v71
    %v73 = vsub.f32 0.0, %v72
    %v74 = vmul.f32 %v73, 1.442695
    %v75 = vpow.pop %v74
    %v76 = vmul.f32 %v61, -0.5
    %v77 = vadd.f32 %v76, 0.75
    %v78 = vsub.f32 1.0, %v75
    %v79 = vmul.f32 %v78, %v78
    %v80 = vmul.f32 %v77, %v79
    %v81 = vmul.f32 %v80, %v72
    %p82 = scmp.lt.s32.totalorder %s54, 0
    // Predicated region
    $region22: #{tpu_custom_call.1} parent=1 // pred_check
      %p83 = pneg %p82
    $region23: #{tpu_custom_call.1} parent=1 // pred_check_branch
      %85 = sbr.rel (%p83) target = $region25
    $region24: #{tpu_custom_call.1} parent=1 // pred_region
      %v86 = vld [vmem:[#allocation7] sm:$0x1]
      %v87 = vadd.f32 %v81, 0.0
      %v88 = vadd.f32 %v86, %v87
      %89 = vst [vmem:[#allocation7] sm:$0x1] %v88
    $region25: #{tpu_custom_call.1} parent=1 // pred_fallthru
      _
    %p90 = scmp.eq.s32.totalorder %s54, 0
    // Predicated region
    $region26: #{tpu_custom_call.1} parent=1 // pred_check
      %p91 = pneg %p90
    $region27: #{tpu_custom_call.1} parent=1 // pred_check_branch
      %93 = sbr.rel (%p91) target = $region29
    $region28: #{tpu_custom_call.1} parent=1 // pred_region
      %v94 = vlaneseq
      %v95 = vshrl.u32 %v94, 7
      %v96 = vlaneseq
      %v97 = vand.u32 %v96, 127
      %v98 = vstv %s54
      %v99 = vadd.s32 %v98, %v95
      %v100 = vmul.u32 %v99, 128
      %v101 = vadd.s32 %v100, %v97
      %v102 = vld [vmem:[#allocation7] sm:$0x1]
      %vm103 = vcmp.lt.s32.totalorder %v101, 20
      %v104 = vsel %vm103, %v81, 0.0
      %v105 = vadd.f32 %v104, 0.0
      %v106 = vadd.f32 %v102, %v105
      %107 = vst [vmem:[#allocation7] sm:$0x1] %v106
    $region29: #{tpu_custom_call.1} parent=1 // pred_fallthru
      _
    // Predicated region
    $region30: #{tpu_custom_call.1} parent=1 // pred_check
      _
    $region31: #{tpu_custom_call.1} parent=1 // pred_check_branch
      %109 = sbr.rel (0) target = $region33
    $region32: #{tpu_custom_call.1} parent=1 // pred_region
      %111 = vsyncadd [#allocation4], 0
      %s113 = sshll.u32 [#allocation7], 4
      %s114 = int_to_ptr.vmem [resolvable:$true] %s113
      %s115 = sshll.u32 %s2, 4
      %s116 = int_to_ptr.hbm [resolvable:$true] %s115
      %118 = dma.vmem_to_hbm [thread:$0]  %s114, 16, %s116, [#allocation4]
    $region33: #{tpu_custom_call.1} parent=1 // pred_fallthru
      _
    // Predicated region
    $region34: #{tpu_custom_call.1} parent=1 // pred_check
      _
    $region35: #{tpu_custom_call.1} parent=1 // pred_check_branch
      %120 = sbr.rel (0) target = $region37
    $region36: #{tpu_custom_call.1} parent=1 // pred_region
      %122 = dma.done [#allocation4], 16
    $region37: #{tpu_custom_call.1} parent=1 // pred_fallthru
      _
    %123 = vsyncpa [#allocation3], 1
    %124 = vsyncpa [#allocation6], 1
    %125 = vsyncpa [#allocation4], 1

</llo_original>
